<compile_context>
chip_gen: v6e
topology: v6e:2x2x1
jax: 0.10.0
libtpu: 0.0.40
codegen_flags: <defaults>
</compile_context>

<pallas_src>
import functools

import jax
import jax.numpy as jnp
from jax import lax
from jax.experimental import pallas as pl
from jax.experimental.pallas import tpu as pltpu


def _spatial_att_kernel(x_ref, w_ref, b_ref, o_ref, *, H, W):
    # x_ref block: (BT, C, HWp) in VMEM (padded H*W on lanes).
    # w_ref: (18,) f32 in SMEM = conv weight (1,2,3,3) flattened row-major
    #        ([avg-channel 3x3, max-channel 3x3]); b_ref: (1,) f32 in SMEM.
    BT, C, HWp = x_ref.shape
    HW = H * W

    # ---- channel pooling: one full-block read, sublane (axis=1) reductions ----
    xv = x_ref[...]                                        # native dtype
    s = jnp.sum(xv.astype(jnp.float32), axis=1)            # (BT, HWp) f32
    mx = jnp.max(xv, axis=1).astype(jnp.float32)           # (BT, HWp) f32
    avg = s * (1.0 / C)

    # ---- conv weights / bias: read the 19 SMEM scalars once, up front ----
    wv = [w_ref[i] for i in range(18)]
    bias = b_ref[0]

    # ---- boundary masks over the flattened spatial index (no pad/concat) ----
    k = lax.broadcasted_iota(jnp.int32, (1, HWp), 1)
    if W & (W - 1) == 0:
        col = jnp.bitwise_and(k, W - 1)                    # k % W (W power of 2)
    else:
        col = k % W
    col_mask = {-1: col >= 1, 0: None, 1: col <= W - 2}
    row_mask = {-1: k >= W, 0: None, 1: k < HW - W}        # row>=1 / row<=H-2

    def shift_flat(q, amount):
        # result[k] = q[k + amount] (circular over HWp); wraps get masked out.
        if amount == 0:
            return q
        return pltpu.roll(q, (-amount) % HWp, 1)

    def col_shifted(q):
        out = {}
        for oj in (-1, 0, 1):
            v = shift_flat(q, oj)
            m = col_mask[oj]
            out[oj] = v if m is None else jnp.where(m, v, 0.0)
        return out

    # 3 lane-shifted copies of each pooled map, reused across all 3 row shifts.
    avg_j = col_shifted(avg)
    max_j = col_shifted(mx)

    # ---- 3x3 cross-correlation (padding=1); bias added once at the end ----
    acc = None
    for oi in (-1, 0, 1):
        t = None
        for oj in (-1, 0, 1):
            wa = wv[(oi + 1) * 3 + (oj + 1)]               # avg-channel tap
            wm = wv[9 + (oi + 1) * 3 + (oj + 1)]           # max-channel tap
            term = wa * avg_j[oj] + wm * max_j[oj]
            t = term if t is None else t + term
        t = shift_flat(t, oi * W)                          # shift by whole rows
        rm = row_mask[oi]
        if rm is not None:
            t = jnp.where(rm, t, 0.0)
        acc = t if acc is None else acc + t

    att = jax.nn.sigmoid(acc + bias)                       # (BT, HWp) f32

    # ---- gate the input in its native dtype (no full-block upcast on bf16) ----
    att_n = att.astype(xv.dtype)
    o_ref[...] = (xv * att_n[:, None, :]).astype(o_ref.dtype)


def _pick_batch_tile(B, per_row_bytes, budget_bytes):
    """Batch-tile whose per-step VMEM footprint (blocks + temporaries) fits."""
    bt = max(1, min(B, int(budget_bytes // max(per_row_bytes, 1))))
    # Keep >= 2 grid steps when B allows it (pipelining / both v7x cores).
    if bt >= B and B >= 2:
        bt = pl.cdiv(B, 2)
    # Prefer a divisor of B at or below bt (avoids a masked partial last block)
    # unless that would more than double the number of grid steps.
    divs = [d for d in range(1, bt + 1) if B % d == 0]
    best_div = max(divs)
    if pl.cdiv(B, best_div) <= 2 * pl.cdiv(B, bt):
        bt = best_div
    return bt


@jax.jit
def spatial_att(x, conv_w, conv_b):
    """x: (B, C, H, W); conv_w: (1, 2, 3, 3); conv_b: (1,)."""
    B, C, H, W = x.shape
    HW = H * W
    HWp = ((HW + 127) // 128) * 128                       # lane-dense last dim
    itemsize = jnp.dtype(x.dtype).itemsize

    x_flat = x.reshape(B, C, HW)
    if HWp != HW:
        x_flat = jnp.pad(x_flat, ((0, 0), (0, 0), (0, HWp - HW)))
    w_flat = conv_w.reshape(-1).astype(jnp.float32)       # (18,)
    b = conv_b.reshape(-1).astype(jnp.float32)            # (1,)

    # Per-batch-row VMEM footprint: double-buffered in + out blocks, plus the
    # ~12 live (1, HWp) f32 temporaries (pooled maps, 6 shifts, acc, t, att).
    io_bytes = 2 * 2 * C * HWp * itemsize
    tmp_bytes = 12 * HWp * 4
    BT = _pick_batch_tile(B, io_bytes + tmp_bytes, budget_bytes=24 * 1024 * 1024)
    grid = (pl.cdiv(B, BT),)
    # For C*HWp blocks that would not fit even at BT=1 (huge maps on v7x's
    # 64 MiB VMEM), an H-tile + 1-row-halo split would be required; not needed
    # at these sizes.

    cost = pl.CostEstimate(
        flops=int(3 * B * C * HW + 40 * B * HW),
        transcendentals=int(B * HW),
        bytes_accessed=int(2 * B * C * HW * itemsize),
    )

    kernel = functools.partial(_spatial_att_kernel, H=H, W=W)
    out_flat = pl.pallas_call(
        kernel,
        out_shape=jax.ShapeDtypeStruct((B, C, HWp), x.dtype),
        grid=grid,
        in_specs=[
            pl.BlockSpec((BT, C, HWp), lambda i: (i, 0, 0)),
            pl.BlockSpec(memory_space=pltpu.MemorySpace.SMEM),
            pl.BlockSpec(memory_space=pltpu.MemorySpace.SMEM),
        ],
        out_specs=pl.BlockSpec((BT, C, HWp), lambda i: (i, 0, 0)),
        compiler_params=pltpu.CompilerParams(
            dimension_semantics=("parallel",),
            vmem_limit_bytes=48 * 1024 * 1024,
        ),
        cost_estimate=cost,
    )(x_flat, w_flat, b)

    if HWp != HW:
        out_flat = out_flat[..., :HW]
    return out_flat.reshape(B, C, H, W)


def spatial_att_ref(x, conv_w, conv_b):
    """Pure-JAX reference of the PyTorch forward (for verification)."""
    avg = jnp.mean(x, axis=1, keepdims=True)
    mx = jnp.max(x, axis=1, keepdims=True)
    cat = jnp.concatenate([avg, mx], axis=1)              # (B, 2, H, W)
    conv = lax.conv_general_dilated(
        cat, conv_w, window_strides=(1, 1), padding="SAME",
        dimension_numbers=("NCHW", "OIHW", "NCHW"))
    conv = conv + conv_b[None, :, None, None]
    return x * jax.nn.sigmoid(conv)


if __name__ == "__main__":
    key = jax.random.PRNGKey(0)
    kx, kw, kb = jax.random.split(key, 3)

    B, C, H, W = 2, 4, 16, 16
    x = jax.random.normal(kx, (B, C, H, W), dtype=jnp.float32)

    # Deterministic Conv2d(2, 1, 3) init (PyTorch-style uniform bound).
    fan_in = 2 * 3 * 3
    bound = 1.0 / (fan_in ** 0.5)
    conv_w = jax.random.uniform(kw, (1, 2, 3, 3), jnp.float32, -bound, bound)
    conv_b = jax.random.uniform(kb, (1,), jnp.float32, -bound, bound)

    out = spatial_att(x, conv_w, conv_b)
    out = jax.block_until_ready(out)

    ref = spatial_att_ref(x, conv_w, conv_b)
    assert out.shape == (B, C, H, W)
    assert jnp.allclose(out, ref, atol=1e-5, rtol=1e-5)
    print("KERNEL_OK")
</pallas_src>

<mosaic_0001>
module attributes {stable_mosaic.version = 11 : i64} {
  func.func @_spatial_att_kernel(%arg0: i32, %arg1: memref<1x4x256xf32, #tpu.memory_space<vmem>>, %arg2: memref<18xf32, #tpu.memory_space<smem>>, %arg3: memref<1xf32, #tpu.memory_space<smem>>, %arg4: memref<1x4x256xf32, #tpu.memory_space<vmem>>) attributes {dimension_semantics = [#tpu.dimension_semantics<parallel>], iteration_bounds = array<i64: 2>, scalar_prefetch = 0 : i64, scratch_operands = 0 : i64, tpu.core_type = #tpu.core_type<tc>, window_params = [{transform_indices = @transform_0, window_bounds = array<i64: 1, 4, 256>}, {transform_indices = @transform_1, window_bounds = array<i64: 18>}, {transform_indices = @transform_2, window_bounds = array<i64: 1>}, {transform_indices = @transform_3, window_bounds = array<i64: 1, 4, 256>}]} {
    %c0 = arith.constant 0 : index
    %c0_0 = arith.constant 0 : index
    %c0_1 = arith.constant 0 : index
    %0 = vector.load %arg1[%c0, %c0_0, %c0_1] : memref<1x4x256xf32, #tpu.memory_space<vmem>>, vector<1x4x256xf32>
    %cst = arith.constant dense<0.000000e+00> : vector<1x256xf32>
    %1 = vector.multi_reduction <add>, %0, %cst [1] : vector<1x4x256xf32> to vector<1x256xf32>
    %cst_2 = arith.constant dense<0xFF800000> : vector<1x256xf32>
    %2 = vector.multi_reduction <maximumf>, %0, %cst_2 [1] : vector<1x4x256xf32> to vector<1x256xf32>
    %cst_3 = arith.constant 2.500000e-01 : f32
    %3 = vector.broadcast %cst_3 : f32 to vector<1x256xf32>
    %4 = arith.mulf %1, %3 : vector<1x256xf32>
    %c0_4 = arith.constant 0 : index
    %5 = memref.load %arg2[%c0_4] : memref<18xf32, #tpu.memory_space<smem>>
    %c1 = arith.constant 1 : index
    %6 = memref.load %arg2[%c1] : memref<18xf32, #tpu.memory_space<smem>>
    %c2 = arith.constant 2 : index
    %7 = memref.load %arg2[%c2] : memref<18xf32, #tpu.memory_space<smem>>
    %c3 = arith.constant 3 : index
    %8 = memref.load %arg2[%c3] : memref<18xf32, #tpu.memory_space<smem>>
    %c4 = arith.constant 4 : index
    %9 = memref.load %arg2[%c4] : memref<18xf32, #tpu.memory_space<smem>>
    %c5 = arith.constant 5 : index
    %10 = memref.load %arg2[%c5] : memref<18xf32, #tpu.memory_space<smem>>
    %c6 = arith.constant 6 : index
    %11 = memref.load %arg2[%c6] : memref<18xf32, #tpu.memory_space<smem>>
    %c7 = arith.constant 7 : index
    %12 = memref.load %arg2[%c7] : memref<18xf32, #tpu.memory_space<smem>>
    %c8 = arith.constant 8 : index
    %13 = memref.load %arg2[%c8] : memref<18xf32, #tpu.memory_space<smem>>
    %c9 = arith.constant 9 : index
    %14 = memref.load %arg2[%c9] : memref<18xf32, #tpu.memory_space<smem>>
    %c10 = arith.constant 10 : index
    %15 = memref.load %arg2[%c10] : memref<18xf32, #tpu.memory_space<smem>>
    %c11 = arith.constant 11 : index
    %16 = memref.load %arg2[%c11] : memref<18xf32, #tpu.memory_space<smem>>
    %c12 = arith.constant 12 : index
    %17 = memref.load %arg2[%c12] : memref<18xf32, #tpu.memory_space<smem>>
    %c13 = arith.constant 13 : index
    %18 = memref.load %arg2[%c13] : memref<18xf32, #tpu.memory_space<smem>>
    %c14 = arith.constant 14 : index
    %19 = memref.load %arg2[%c14] : memref<18xf32, #tpu.memory_space<smem>>
    %c15 = arith.constant 15 : index
    %20 = memref.load %arg2[%c15] : memref<18xf32, #tpu.memory_space<smem>>
    %c16 = arith.constant 16 : index
    %21 = memref.load %arg2[%c16] : memref<18xf32, #tpu.memory_space<smem>>
    %c17 = arith.constant 17 : index
    %22 = memref.load %arg2[%c17] : memref<18xf32, #tpu.memory_space<smem>>
    %c0_5 = arith.constant 0 : index
    %23 = memref.load %arg3[%c0_5] : memref<1xf32, #tpu.memory_space<smem>>
    %24 = tpu.iota {dimensions = array<i32: 1>} : vector<1x256xi32>
    %c15_i32 = arith.constant 15 : i32
    %25 = vector.broadcast %c15_i32 : i32 to vector<1x256xi32>
    %26 = arith.andi %24, %25 : vector<1x256xi32>
    %c1_i32 = arith.constant 1 : i32
    %27 = vector.broadcast %c1_i32 : i32 to vector<1x256xi32>
    %28 = arith.cmpi sge, %26, %27 : vector<1x256xi32>
    %c14_i32 = arith.constant 14 : i32
    %29 = vector.broadcast %c14_i32 : i32 to vector<1x256xi32>
    %30 = arith.cmpi sle, %26, %29 : vector<1x256xi32>
    %c16_i32 = arith.constant 16 : i32
    %31 = vector.broadcast %c16_i32 : i32 to vector<1x256xi32>
    %32 = arith.cmpi sge, %24, %31 : vector<1x256xi32>
    %c240_i32 = arith.constant 240 : i32
    %33 = vector.broadcast %c240_i32 : i32 to vector<1x256xi32>
    %34 = arith.cmpi slt, %24, %33 : vector<1x256xi32>
    %c1_i32_6 = arith.constant 1 : i32
    %35 = tpu.dynamic_rotate %4 by %c1_i32_6 dim 1 : vector<1x256xf32>, i32 -> vector<1x256xf32>
    %cst_7 = arith.constant 0.000000e+00 : f32
    %36 = vector.broadcast %cst_7 : f32 to vector<1x256xf32>
    %37 = arith.select %28, %35, %36 : vector<1x256xi1>, vector<1x256xf32>
    %c255_i32 = arith.constant 255 : i32
    %38 = tpu.dynamic_rotate %4 by %c255_i32 dim 1 : vector<1x256xf32>, i32 -> vector<1x256xf32>
    %cst_8 = arith.constant 0.000000e+00 : f32
    %39 = vector.broadcast %cst_8 : f32 to vector<1x256xf32>
    %40 = arith.select %30, %38, %39 : vector<1x256xi1>, vector<1x256xf32>
    %c1_i32_9 = arith.constant 1 : i32
    %41 = tpu.dynamic_rotate %2 by %c1_i32_9 dim 1 : vector<1x256xf32>, i32 -> vector<1x256xf32>
    %cst_10 = arith.constant 0.000000e+00 : f32
    %42 = vector.broadcast %cst_10 : f32 to vector<1x256xf32>
    %43 = arith.select %28, %41, %42 : vector<1x256xi1>, vector<1x256xf32>
    %c255_i32_11 = arith.constant 255 : i32
    %44 = tpu.dynamic_rotate %2 by %c255_i32_11 dim 1 : vector<1x256xf32>, i32 -> vector<1x256xf32>
    %cst_12 = arith.constant 0.000000e+00 : f32
    %45 = vector.broadcast %cst_12 : f32 to vector<1x256xf32>
    %46 = arith.select %30, %44, %45 : vector<1x256xi1>, vector<1x256xf32>
    %47 = vector.broadcast %5 : f32 to vector<1x256xf32>
    %48 = arith.mulf %47, %37 : vector<1x256xf32>
    %49 = vector.broadcast %14 : f32 to vector<1x256xf32>
    %50 = arith.mulf %49, %43 : vector<1x256xf32>
    %51 = arith.addf %48, %50 : vector<1x256xf32>
    %52 = vector.broadcast %6 : f32 to vector<1x256xf32>
    %53 = arith.mulf %52, %4 : vector<1x256xf32>
    %54 = vector.broadcast %15 : f32 to vector<1x256xf32>
    %55 = arith.mulf %54, %2 : vector<1x256xf32>
    %56 = arith.addf %53, %55 : vector<1x256xf32>
    %57 = arith.addf %51, %56 : vector<1x256xf32>
    %58 = vector.broadcast %7 : f32 to vector<1x256xf32>
    %59 = arith.mulf %58, %40 : vector<1x256xf32>
    %60 = vector.broadcast %16 : f32 to vector<1x256xf32>
    %61 = arith.mulf %60, %46 : vector<1x256xf32>
    %62 = arith.addf %59, %61 : vector<1x256xf32>
    %63 = arith.addf %57, %62 : vector<1x256xf32>
    %c16_i32_13 = arith.constant 16 : i32
    %64 = tpu.dynamic_rotate %63 by %c16_i32_13 dim 1 : vector<1x256xf32>, i32 -> vector<1x256xf32>
    %cst_14 = arith.constant 0.000000e+00 : f32
    %65 = vector.broadcast %cst_14 : f32 to vector<1x256xf32>
    %66 = arith.select %32, %64, %65 : vector<1x256xi1>, vector<1x256xf32>
    %67 = vector.broadcast %8 : f32 to vector<1x256xf32>
    %68 = arith.mulf %67, %37 : vector<1x256xf32>
    %69 = vector.broadcast %17 : f32 to vector<1x256xf32>
    %70 = arith.mulf %69, %43 : vector<1x256xf32>
    %71 = arith.addf %68, %70 : vector<1x256xf32>
    %72 = vector.broadcast %9 : f32 to vector<1x256xf32>
    %73 = arith.mulf %72, %4 : vector<1x256xf32>
    %74 = vector.broadcast %18 : f32 to vector<1x256xf32>
    %75 = arith.mulf %74, %2 : vector<1x256xf32>
    %76 = arith.addf %73, %75 : vector<1x256xf32>
    %77 = arith.addf %71, %76 : vector<1x256xf32>
    %78 = vector.broadcast %10 : f32 to vector<1x256xf32>
    %79 = arith.mulf %78, %40 : vector<1x256xf32>
    %80 = vector.broadcast %19 : f32 to vector<1x256xf32>
    %81 = arith.mulf %80, %46 : vector<1x256xf32>
    %82 = arith.addf %79, %81 : vector<1x256xf32>
    %83 = arith.addf %77, %82 : vector<1x256xf32>
    %84 = arith.addf %66, %83 : vector<1x256xf32>
    %85 = vector.broadcast %11 : f32 to vector<1x256xf32>
    %86 = arith.mulf %85, %37 : vector<1x256xf32>
    %87 = vector.broadcast %20 : f32 to vector<1x256xf32>
    %88 = arith.mulf %87, %43 : vector<1x256xf32>
    %89 = arith.addf %86, %88 : vector<1x256xf32>
    %90 = vector.broadcast %12 : f32 to vector<1x256xf32>
    %91 = arith.mulf %90, %4 : vector<1x256xf32>
    %92 = vector.broadcast %21 : f32 to vector<1x256xf32>
    %93 = arith.mulf %92, %2 : vector<1x256xf32>
    %94 = arith.addf %91, %93 : vector<1x256xf32>
    %95 = arith.addf %89, %94 : vector<1x256xf32>
    %96 = vector.broadcast %13 : f32 to vector<1x256xf32>
    %97 = arith.mulf %96, %40 : vector<1x256xf32>
    %98 = vector.broadcast %22 : f32 to vector<1x256xf32>
    %99 = arith.mulf %98, %46 : vector<1x256xf32>
    %100 = arith.addf %97, %99 : vector<1x256xf32>
    %101 = arith.addf %95, %100 : vector<1x256xf32>
    %c240_i32_15 = arith.constant 240 : i32
    %102 = tpu.dynamic_rotate %101 by %c240_i32_15 dim 1 : vector<1x256xf32>, i32 -> vector<1x256xf32>
    %cst_16 = arith.constant 0.000000e+00 : f32
    %103 = vector.broadcast %cst_16 : f32 to vector<1x256xf32>
    %104 = arith.select %34, %102, %103 : vector<1x256xi1>, vector<1x256xf32>
    %105 = arith.addf %84, %104 : vector<1x256xf32>
    %106 = vector.broadcast %23 : f32 to vector<1x256xf32>
    %107 = arith.addf %105, %106 : vector<1x256xf32>
    %108 = arith.negf %107 : vector<1x256xf32>
    %109 = math.exp %108 : vector<1x256xf32>
    %cst_17 = arith.constant 1.000000e+00 : f32
    %110 = vector.broadcast %cst_17 : f32 to vector<1x256xf32>
    %111 = arith.addf %110, %109 : vector<1x256xf32>
    %112 = arith.divf %110, %111 : vector<1x256xf32>
    %113 = vector.shape_cast %112 : vector<1x256xf32> to vector<1x1x256xf32>
    %114 = vector.broadcast %113 : vector<1x1x256xf32> to vector<1x4x256xf32>
    %115 = arith.mulf %0, %114 : vector<1x4x256xf32>
    %c0_18 = arith.constant 0 : index
    %c0_19 = arith.constant 0 : index
    %c0_20 = arith.constant 0 : index
    %116 = vector.load %arg4[%c0_18, %c0_19, %c0_20] : memref<1x4x256xf32, #tpu.memory_space<vmem>>, vector<1x4x256xf32>
    tpu.vector_store %arg4[%c0_18, %c0_19, %c0_20], %115 {strides = array<i32>} : memref<1x4x256xf32, #tpu.memory_space<vmem>>, vector<1x4x256xf32>,
    return
  }
  func.func @transform_0(%arg0: i32) -> (i32, i32, i32) {
    %c0_i32 = arith.constant 0 : i32
    %c0_i32_0 = arith.constant 0 : i32
    %c0_i32_1 = arith.constant 0 : i32
    return %arg0, %c0_i32, %c0_i32_0 : i32, i32, i32
  }
  func.func @transform_1(%arg0: i32) -> i32 {
    %c0_i32 = arith.constant 0 : i32
    %c0_i32_0 = arith.constant 0 : i32
    return %c0_i32 : i32
  }
  func.func @transform_2(%arg0: i32) -> i32 {
    %c0_i32 = arith.constant 0 : i32
    %c0_i32_0 = arith.constant 0 : i32
    return %c0_i32 : i32
  }
  func.func @transform_3(%arg0: i32) -> (i32, i32, i32) {
    %c0_i32 = arith.constant 0 : i32
    %c0_i32_0 = arith.constant 0 : i32
    %c0_i32_1 = arith.constant 0 : i32
    return %arg0, %c0_i32, %c0_i32_0 : i32, i32, i32
  }
}

</mosaic_0001>

<llo_original>
// kernel: spatial_att.1
$region0: #{spatial_att.1}
  #allocation0 [shape = 'u32[]', space=smem, size = 0x4, offset = 0x4, fixed_abs, tag = 'smem constant byte address 0x4 - core index']
  #allocation1 [shape = 'u32[144,128]{1,0:T(1,128)}', space=vmem, size = 0x12000, scoped, tag = 'internal scratch']
  #allocation2 [shape = 'f32[1]{0:T(128)S(6)}', space=smem, size = 0x200, scoped, tag = 'scoped memory for spatial_att.1']
  %s0 = inlined_call_operand.vmem [shape: f32[2,4,256], index: 0, kind: input, shape index: {}]
  %s1 = inlined_call_operand.vmem [shape: f32[18], index: 1, kind: input, shape index: {}]
  %s2 = inlined_call_operand.<no memory space> [shape: f32[1], index: 2, kind: input, shape index: {}]
  %s3 = inlined_call_operand.vmem [shape: f32[2,4,256], index: 3, kind: output, shape index: {}]
  %s4 = sld [smem:[#allocation0]]
  $region49: #{spatial_att.1} parent=0
    _
  %s6 = ssub.s32 1, %s4
  %s7 = scalar_select 0, %s6, %s4
  %8 = sst [smem:[#allocation2]] %s2
  $region1: #{spatial_att.1} parent=0
    #allocation3 [shape = 'u8[512]{0}', space=smem, size = 0x200, scoped, tag = 'input window, operand 1, single buffered']
    #allocation4 [shape = 's32[2]{0}', space=sflag, size = 0x8, scoped, tag = 'scoped memory for spatial_att.1']
    %9 = vsyncpa [#allocation4], 0
    loop: start=0, step=1, limit=4
    $region2: #{spatial_att.1} parent=1 // loop_pre_header
      _
    $region3: #{spatial_att.1} parent=1 // loop_header
      %s11 = sphi 0, %s15
      %p12 = scmp.ge.s32.totalorder %s11, 4
      %s21 = sphi 0, %s23
      %s24 = sphi 0, %s21
      %s25 = sphi 0, %s24
      %s41 = sphi 0, %s25
      %s45 = sphi 0, %s45
      %s47 = sphi 0, %s45
      %s48 = sphi 0, %s47
      %s62 = sphi 0, %s48
      %s66 = sphi 0, %s66
      %s68 = sphi 0, %s66
      %s69 = sphi 0, %s68
      %s83 = sphi 0, %s69
      %s89 = sphi 0, %s91
      %s92 = sphi 0, %s89
      %s93 = sphi 0, %s92
      %s109 = sphi 0, %s93
    $region4: #{spatial_att.1} parent=1 // loop_header_branch
      %14 = sbr.rel (%p12) target = $region8
    $region5: #{spatial_att.1} parent=1 // loop_body
      %s16 = ssub.s32 %s11, 1
      %s17 = ssub.s32 %s11, 2
      %s18 = sadd.s32 %s11, 1
      %s19 = ssub.s32 %s11, %s18
      %p20 = scmp.eq.s32.totalorder %s19, 0
      %s22 = sadd.s32 %s21, 1
      %s23 = scalar_select %p20, %s21, %s22
      %p26 = pneg %p20
      %p27 = scmp.eq.s32.totalorder %s11, 1
      %p28 = por %p26, %p27
      %p29 = scmp.ne.s32.totalorder %s21, %s24
      %p30 = scmp.eq.s32.totalorder %s11, 0
      %p31 = por %p29, %p30
      %p32 = scmp.ne.s32.totalorder %s21, %s24
      %p33 = scmp.eq.s32.totalorder %s16, 1
      %p34 = por %p32, %p33
      %p35 = scmp.ne.s32.totalorder %s24, %s25
      %p36 = scmp.eq.s32.totalorder %s16, 0
      %p37 = por %p35, %p36
      %p38 = scmp.ne.s32.totalorder %s24, %s25
      %p39 = scmp.eq.s32.totalorder %s17, 1
      %p40 = por %p38, %p39
      %p42 = scmp.ne.s32.totalorder %s25, %s41
      %p43 = scmp.eq.s32.totalorder %s17, 0
      %p44 = por %p42, %p43
      %s46 = sadd.s32 %s45, 1
      %p49 = scmp.eq.s32.totalorder %s11, 1
      %p50 = scmp.ne.s32.totalorder %s45, %s47
      %p51 = scmp.eq.s32.totalorder %s11, 0
      %p52 = por %p50, %p51
      %p53 = scmp.ne.s32.totalorder %s45, %s47
      %p54 = scmp.eq.s32.totalorder %s16, 1
      %p55 = por %p53, %p54
      %p56 = scmp.ne.s32.totalorder %s47, %s48
      %p57 = scmp.eq.s32.totalorder %s16, 0
      %p58 = por %p56, %p57
      %p59 = scmp.ne.s32.totalorder %s47, %s48
      %p60 = scmp.eq.s32.totalorder %s17, 1
      %p61 = por %p59, %p60
      %p63 = scmp.ne.s32.totalorder %s48, %s62
      %p64 = scmp.eq.s32.totalorder %s17, 0
      %p65 = por %p63, %p64
      %s67 = sadd.s32 %s66, 1
      %p70 = scmp.eq.s32.totalorder %s11, 1
      %p71 = scmp.ne.s32.totalorder %s66, %s68
      %p72 = scmp.eq.s32.totalorder %s11, 0
      %p73 = por %p71, %p72
      %p74 = scmp.ne.s32.totalorder %s66, %s68
      %p75 = scmp.eq.s32.totalorder %s16, 1
      %p76 = por %p74, %p75
      %p77 = scmp.ne.s32.totalorder %s68, %s69
      %p78 = scmp.eq.s32.totalorder %s16, 0
      %p79 = por %p77, %p78
      %p80 = scmp.ne.s32.totalorder %s68, %s69
      %p81 = scmp.eq.s32.totalorder %s17, 1
      %p82 = por %p80, %p81
      %p84 = scmp.ne.s32.totalorder %s69, %s83
      %p85 = scmp.eq.s32.totalorder %s17, 0
      %p86 = por %p84, %p85
      %s87 = ssub.s32 %s11, %s18
      %p88 = scmp.eq.s32.totalorder %s87, 0
      %s90 = sadd.s32 %s89, 1
      %s91 = scalar_select %p88, %s89, %s90
      %p94 = pneg %p88
      %p95 = scmp.eq.s32.totalorder %s11, 1
      %p96 = por %p94, %p95
      %p97 = scmp.ne.s32.totalorder %s89, %s92
      %p98 = scmp.eq.s32.totalorder %s11, 0
      %p99 = por %p97, %p98
      %p100 = scmp.ne.s32.totalorder %s89, %s92
      %p101 = scmp.eq.s32.totalorder %s16, 1
      %p102 = por %p100, %p101
      %p103 = scmp.ne.s32.totalorder %s92, %s93
      %p104 = scmp.eq.s32.totalorder %s16, 0
      %p105 = por %p103, %p104
      %p106 = scmp.ne.s32.totalorder %s92, %s93
      %p107 = scmp.eq.s32.totalorder %s17, 1
      %p108 = por %p106, %p107
      %p110 = scmp.ne.s32.totalorder %s93, %s109
      %p111 = scmp.eq.s32.totalorder %s17, 0
      %p112 = por %p110, %p111
      %p113 = scmp.le.s32.totalorder 1, %s11
      %p114 = scmp.lt.s32.totalorder %s11, 3
      %p115 = pnand %p113, %p114
      %p116 = pneg %p115
      // Predicated region
      $region9: #{spatial_att.1} parent=5 // pred_check
        _
      $region10: #{spatial_att.1} parent=5 // pred_check_branch
        %118 = sbr.rel (%p115) target = $region12
      $region11: #{spatial_att.1} parent=5 // pred_region
        %s119 = ssub.s32 %s11, 1
        // Predicated region
        $region13: #{spatial_att.1} parent=11 // pred_check
          %p120 = pneg %p58
        $region14: #{spatial_att.1} parent=11 // pred_check_branch
          %122 = sbr.rel (%p120) target = $region16
        $region15: #{spatial_att.1} parent=11 // pred_region
          %s124 = ssub.s32 16, 16
          %125 = vsyncadd [#allocation4], %s124
          %s127 = sshll.u32 %s1, 4
          %s128 = int_to_ptr.vmem [resolvable:$true] %s127
          %130 = dma.vmem_to_smem %s128, 16, [#allocation3], [#allocation4]
        $region16: #{spatial_att.1} parent=11 // pred_fallthru
          _
        // Predicated region
        $region17: #{spatial_att.1} parent=11 // pred_check
          %p131 = pneg %p79
        $region18: #{spatial_att.1} parent=11 // pred_check_branch
          %133 = sbr.rel (%p131) target = $region20
        $region19: #{spatial_att.1} parent=11 // pred_region
          _
        $region20: #{spatial_att.1} parent=11 // pred_fallthru
          _
      $region12: #{spatial_att.1} parent=5 // pred_fallthru
        _
      %p134 = scmp.lt.s32.totalorder %s11, 2
      // Predicated region
      $region21: #{spatial_att.1} parent=5 // pred_check
        %p135 = pneg %p134
      $region22: #{spatial_att.1} parent=5 // pred_check_branch
        %137 = sbr.rel (%p135) target = $region24
      $region23: #{spatial_att.1} parent=5 // pred_region
        // Predicated region
        $region25: #{spatial_att.1} parent=23 // pred_check
          %p138 = pneg %p31
        $region26: #{spatial_att.1} parent=23 // pred_check_branch
          %140 = sbr.rel (%p138) target = $region28
        $region27: #{spatial_att.1} parent=23 // pred_region
          %p141 = scmp.lt.s32.totalorder %s11, 1
          %s142 = scalar_select %p141, %s11, 1
          %s143 = smul.addr %s142, 2
          %s144 = smul.addr %s143, 4
          %s145 = scalar_lea.vmem %s0, %s144
        $region28: #{spatial_att.1} parent=23 // pred_fallthru
          _
      $region24: #{spatial_att.1} parent=5 // pred_fallthru
        _
      %p146 = scmp.le.s32.totalorder 1, %s11
      %p147 = scmp.lt.s32.totalorder %s11, 3
      %p148 = pnand %p146, %p147
      %p149 = pneg %p148
      // Predicated region
      $region29: #{spatial_att.1} parent=5 // pred_check
        _
      $region30: #{spatial_att.1} parent=5 // pred_check_branch
        %151 = sbr.rel (%p148) target = $region32
      $region31: #{spatial_att.1} parent=5 // pred_region
        %s152 = ssub.s32 %s11, 1
        // Predicated region
        $region33: #{spatial_att.1} parent=31 // pred_check
          %p153 = pneg %p58
        $region34: #{spatial_att.1} parent=31 // pred_check_branch
          %155 = sbr.rel (%p153) target = $region36
        $region35: #{spatial_att.1} parent=31 // pred_region
          %156 = dma.done [#allocation4], 16
        $region36: #{spatial_att.1} parent=31 // pred_fallthru
          _
        %157 = sfence
        %p158 = scmp.lt.s32.totalorder %s16, 1
        %s159 = scalar_select %p158, %s16, 1
        %s160 = smul.addr %s159, 2
        %s161 = smul.addr %s160, 4
        %s162 = scalar_lea.vmem %s0, %s161
        %p163 = pneg %p37
        %p164 = pneg %p34
        %p165 = pneg %p58
        %p166 = pneg %p55
        %p167 = pneg %p79
        %p168 = pneg %p76
        %p169 = pneg %p105
        %p170 = pneg %p102
        %p171 = scmp.lt.s32.totalorder %s16, 1
        %s172 = scalar_select %p171, %s16, 1
        %s173 = smul.addr %s172, 2
        %s174 = smul.addr %s173, 4
        %s175 = scalar_lea.vmem %s3, %s174
        %p176 = scmp.lt.s32.totalorder %s16, 1
        %s177 = scalar_select %p176, %s16, 1
        %s178 = smul.addr %s177, 2
        %s179 = smul.addr %s178, 4
        %s180 = scalar_lea.vmem %s0, %s179
        %p181 = scmp.lt.s32.totalorder %s16, 1
        %s182 = scalar_select %p181, %s16, 1
        %s183 = smul.addr %s182, 2
        %s184 = smul.addr %s183, 4
        %s185 = scalar_lea.vmem %s3, %s184
        %v186 = vld [vmem:[%s180] sm:$0xff]
        %v188 = vcombine.high %v186, %v186
        %vm190 = vcmask 1043456
        %v191 = vsel %vm190, %v186, 0.0
        %v192 = vrot.slane %v191, 4
        %v193 = vadd.f32 %v191, %v192
        %v194 = vrot.slane %v193, 2
        %v195 = vadd.f32 %v193, %v194
        %v196 = vrot.slane %v195, 1
        %v197 = vadd.f32 %v195, %v196
        %v198 = vsel %vm190, %v188, 0.0
        %v199 = vrot.slane %v198, 4
        %v200 = vadd.f32 %v198, %v199
        %v201 = vrot.slane %v200, 2
        %v202 = vadd.f32 %v200, %v201
        %v203 = vrot.slane %v202, 1
        %v204 = vadd.f32 %v202, %v203
        %v205 = vsel %vm190, %v186, -inf
        %v206 = vrot.slane %v205, 4
        %v207 = vmax.f32 %v205, %v206
        %v208 = vrot.slane %v207, 2
        %v209 = vmax.f32 %v207, %v208
        %v210 = vrot.slane %v209, 1
        %v211 = vmax.f32 %v209, %v210
        %v212 = vsel %vm190, %v188, -inf
        %v213 = vrot.slane %v212, 4
        %v214 = vmax.f32 %v212, %v213
        %v215 = vrot.slane %v214, 2
        %v216 = vmax.f32 %v214, %v215
        %v217 = vrot.slane %v216, 1
        %v218 = vmax.f32 %v216, %v217
        %v219 = vmul.f32 %v197, 0.25
        %v220 = vmul.f32 %v204, 0.25
        %s221 = sld [smem:[#allocation3]]
        %s222 = sld [smem:[#allocation3 + $0x1]]
        %s223 = sld [smem:[#allocation3 + $0x2]]
        %s224 = sld [smem:[#allocation3 + $0x3]]
        %s225 = sld [smem:[#allocation3 + $0x4]]
        %s226 = sld [smem:[#allocation3 + $0x5]]
        %s227 = sld [smem:[#allocation3 + $0x6]]
        %s228 = sld [smem:[#allocation3 + $0x7]]
        %s229 = sld [smem:[#allocation3 + $0x8]]
        %s230 = sld [smem:[#allocation3 + $0x9]]
        %s231 = sld [smem:[#allocation3 + $0xa]]
        %s232 = sld [smem:[#allocation3 + $0xb]]
        %s233 = sld [smem:[#allocation3 + $0xc]]
        %s234 = sld [smem:[#allocation3 + $0xd]]
        %s235 = sld [smem:[#allocation3 + $0xe]]
        %s236 = sld [smem:[#allocation3 + $0xf]]
        %s237 = sld [smem:[#allocation3 + $0x10]]
        %s238 = sld [smem:[#allocation3 + $0x11]]
        %s239 = sld [smem:[#allocation2]]
        %v240 = vlaneseq
        %v241 = vand.u32 %v240, 127
        %v242 = vadd.s32 %v241, 128
        %v243 = vand.u32 %v241, 15
        %v244 = vand.u32 %v242, 15
        %vm245 = vcmp.ge.s32.totalorder %v243, 1
        %vm246 = vcmp.ge.s32.totalorder %v244, 1
        %vm247 = vcmp.le.s32.totalorder %v243, 14
        %vm248 = vcmp.le.s32.totalorder %v244, 14
        %vm249 = vcmp.ge.s32.totalorder %v241, 16
        %vm250 = vcmp.ge.s32.totalorder %v242, 16
        %vm251 = vcmp.lt.s32.totalorder %v241, 240
        %vm252 = vcmp.lt.s32.totalorder %v242, 240
        %253 = vrot.lane.b32.xlu0 %v219, 1
        %v254 = vpop.permute.xlu0 %253
        %255 = vrot.lane.b32.xlu0 %v220, 1
        %v256 = vpop.permute.xlu0 %255
        %vm257 = vcmp.lt.s32.totalorder %v241, 1
        %v258 = vsel %vm257, %v254, %v256
        %v259 = vsel %vm257, %v256, %v254
        %v260 = vsel %vm245, %v259, 0.0
        %v261 = vsel %vm246, %v258, 0.0
        %262 = vrot.lane.b32.xlu0 %v219, 127
        %v263 = vpop.permute.xlu0 %262
        %264 = vrot.lane.b32.xlu0 %v220, 127
        %v265 = vpop.permute.xlu0 %264
        %vm266 = vcmp.lt.s32.totalorder %v241, 127
        %v267 = vsel %vm266, %v263, %v265
        %v268 = vsel %vm266, %v265, %v263
        %v269 = vsel %vm247, %v267, 0.0
        %v270 = vsel %vm248, %v268, 0.0
        %271 = vrot.lane.b32.xlu0 %v211, 1
        %v272 = vpop.permute.xlu0 %271
        %273 = vrot.lane.b32.xlu0 %v218, 1
        %v274 = vpop.permute.xlu0 %273
        %v275 = vsel %vm257, %v272, %v274
        %v276 = vsel %vm257, %v274, %v272
        %v277 = vsel %vm245, %v276, 0.0
        %v278 = vsel %vm246, %v275, 0.0
        %279 = vrot.lane.b32.xlu0 %v211, 127
        %v280 = vpop.permute.xlu0 %279
        %281 = vrot.lane.b32.xlu0 %v218, 127
        %v282 = vpop.permute.xlu0 %281
        %v283 = vsel %vm266, %v280, %v282
        %v284 = vsel %vm266, %v282, %v280
        %v285 = vsel %vm247, %v283, 0.0
        %v286 = vsel %vm248, %v284, 0.0
        %v287 = vstv %s221
        %v288 = vmul.f32 %v287, %v260
        %v289 = vmul.f32 %v287, %v261
        %v290 = vstv %s230
        %v291 = vmul.f32 %v290, %v277
        %v292 = vmul.f32 %v290, %v278
        %v293 = vadd.f32 %v288, %v291
        %v294 = vadd.f32 %v289, %v292
        %v295 = vstv %s222
        %v296 = vmul.f32 %v295, %v219
        %v297 = vmul.f32 %v295, %v220
        %v298 = vstv %s231
        %v299 = vmul.f32 %v298, %v211
        %v300 = vmul.f32 %v298, %v218
        %v301 = vadd.f32 %v296, %v299
        %v302 = vadd.f32 %v297, %v300
        %v303 = vadd.f32 %v293, %v301
        %v304 = vadd.f32 %v294, %v302
        %v305 = vstv %s223
        %v306 = vmul.f32 %v305, %v269
        %v307 = vmul.f32 %v305, %v270
        %v308 = vstv %s232
        %v309 = vmul.f32 %v308, %v285
        %v310 = vmul.f32 %v308, %v286
        %v311 = vadd.f32 %v306, %v309
        %v312 = vadd.f32 %v307, %v310
        %v313 = vadd.f32 %v303, %v311
        %v314 = vadd.f32 %v304, %v312
        %315 = vrot.lane.b32.xlu0 %v313, 16
        %v316 = vpop.permute.xlu0 %315
        %317 = vrot.lane.b32.xlu0 %v314, 16
        %v318 = vpop.permute.xlu0 %317
        %vm319 = vcmp.lt.s32.totalorder %v241, 16
        %v320 = vsel %vm319, %v316, %v318
        %v321 = vsel %vm319, %v318, %v316
        %v322 = vsel %vm249, %v321, 0.0
        %v323 = vsel %vm250, %v320, 0.0
        %v324 = vstv %s224
        %v325 = vmul.f32 %v324, %v260
        %v326 = vmul.f32 %v324, %v261
        %v327 = vstv %s233
        %v328 = vmul.f32 %v327, %v277
        %v329 = vmul.f32 %v327, %v278
        %v330 = vadd.f32 %v325, %v328
        %v331 = vadd.f32 %v326, %v329
        %v332 = vstv %s225
        %v333 = vmul.f32 %v332, %v219
        %v334 = vmul.f32 %v332, %v220
        %v335 = vstv %s234
        %v336 = vmul.f32 %v335, %v211
        %v337 = vmul.f32 %v335, %v218
        %v338 = vadd.f32 %v333, %v336
        %v339 = vadd.f32 %v334, %v337
        %v340 = vadd.f32 %v330, %v338
        %v341 = vadd.f32 %v331, %v339
        %v342 = vstv %s226
        %v343 = vmul.f32 %v342, %v269
        %v344 = vmul.f32 %v342, %v270
        %v345 = vstv %s235
        %v346 = vmul.f32 %v345, %v285
        %v347 = vmul.f32 %v345, %v286
        %v348 = vadd.f32 %v343, %v346
        %v349 = vadd.f32 %v344, %v347
        %v350 = vadd.f32 %v340, %v348
        %v351 = vadd.f32 %v341, %v349
        %v352 = vadd.f32 %v322, %v350
        %v353 = vadd.f32 %v323, %v351
        %v354 = vstv %s227
        %v355 = vmul.f32 %v354, %v260
        %v356 = vmul.f32 %v354, %v261
        %v357 = vstv %s236
        %v358 = vmul.f32 %v357, %v277
        %v359 = vmul.f32 %v357, %v278
        %v360 = vadd.f32 %v355, %v358
        %v361 = vadd.f32 %v356, %v359
        %v362 = vstv %s228
        %v363 = vmul.f32 %v362, %v219
        %v364 = vmul.f32 %v362, %v220
        %v365 = vstv %s237
        %v366 = vmul.f32 %v365, %v211
        %v367 = vmul.f32 %v365, %v218
        %v368 = vadd.f32 %v363, %v366
        %v369 = vadd.f32 %v364, %v367
        %v370 = vadd.f32 %v360, %v368
        %v371 = vadd.f32 %v361, %v369
        %v372 = vstv %s229
        %v373 = vmul.f32 %v372, %v269
        %v374 = vmul.f32 %v372, %v270
        %v375 = vstv %s238
        %v376 = vmul.f32 %v375, %v285
        %v377 = vmul.f32 %v375, %v286
        %v378 = vadd.f32 %v373, %v376
        %v379 = vadd.f32 %v374, %v377
        %v380 = vadd.f32 %v370, %v378
        %v381 = vadd.f32 %v371, %v379
        %382 = vrot.lane.b32.xlu0 %v380, 112
        %v383 = vpop.permute.xlu0 %382
        %384 = vrot.lane.b32.xlu0 %v381, 112
        %v385 = vpop.permute.xlu0 %384
        %vm386 = vcmp.lt.s32.totalorder %v241, 112
        %v387 = vsel %vm386, %v383, %v385
        %v388 = vsel %vm386, %v385, %v383
        %v389 = vsel %vm251, %v387, 0.0
        %v390 = vsel %vm252, %v388, 0.0
        %v391 = vadd.f32 %v352, %v389
        %v392 = vadd.f32 %v353, %v390
        %v393 = vstv %s239
        %v394 = vadd.f32 %v391, %v393
        %v395 = vadd.f32 %v392, %v393
        %v396 = vxor.u32 %v394, 2147483648
        %v397 = vxor.u32 %v395, 2147483648
        %v398 = vmul.f32 %v396, 1.442695
        %v399 = vpow.pop %v398
        %v400 = vmul.f32 %v397, 1.442695
        %v401 = vpow.pop %v400
        %v402 = vadd.f32 %v399, 1.0
        %v403 = vadd.f32 %v401, 1.0
        %v404 = vrcp.pop %v402
        %v405 = vmul.f32 1.0, %v404
        %v406 = vrcp.pop %v403
        %v407 = vmul.f32 1.0, %v406
        %v408 = vlaneseq
        %v409 = vshrl.u32 %v408, 7
        %v410 = vsub.s32 0, %v409
        %v411 = vrot.slane %v405, %v410
        %v412 = vlaneseq
        %v413 = vshrl.u32 %v412, 7
        %v414 = vsub.s32 0, %v413
        %v415 = vrot.slane %v407, %v414
        %v418 = vcombine.low %v411, %v415
        %v420 = vmul.f32 %v186, %v418
        %421 = vst [vmem:[%s185] sm:$0xff] %v420
        %p422 = scmp.lt.s32.totalorder %s16, 1
        %s423 = scalar_select %p422, %s16, 1
        %s424 = smul.addr %s423, 2
        %s425 = smul.addr %s424, 4
        %s426 = scalar_lea.vmem %s3, %s425
        // Predicated region
        $region37: #{spatial_att.1} parent=31 // pred_check
          %p427 = pneg %p102
        $region38: #{spatial_att.1} parent=31 // pred_check_branch
          %429 = sbr.rel (%p427) target = $region40
        $region39: #{spatial_att.1} parent=31 // pred_region
          _
        $region40: #{spatial_att.1} parent=31 // pred_fallthru
          _
      $region32: #{spatial_att.1} parent=5 // pred_fallthru
        _
      %p430 = scmp.le.s32.totalorder 2, %s11
      // Predicated region
      $region41: #{spatial_att.1} parent=5 // pred_check
        %p431 = pneg %p430
      $region42: #{spatial_att.1} parent=5 // pred_check_branch
        %433 = sbr.rel (%p431) target = $region44
      $region43: #{spatial_att.1} parent=5 // pred_region
        %s434 = ssub.s32 %s11, 2
        // Predicated region
        $region45: #{spatial_att.1} parent=43 // pred_check
          %p435 = pneg %p108
        $region46: #{spatial_att.1} parent=43 // pred_check_branch
          %437 = sbr.rel (%p435) target = $region48
        $region47: #{spatial_att.1} parent=43 // pred_region
          %p438 = scmp.lt.s32.totalorder %s17, 1
          %s439 = scalar_select %p438, %s17, 1
          %s440 = smul.addr %s439, 2
          %s441 = smul.addr %s440, 4
          %s442 = scalar_lea.vmem %s3, %s441
        $region48: #{spatial_att.1} parent=43 // pred_fallthru
          _
      $region44: #{spatial_att.1} parent=5 // pred_fallthru
        _
    $region6: #{spatial_att.1} parent=1 // loop_footer
      %s15 = sadd.s32 1, %s11
    $region7: #{spatial_att.1} parent=1 // loop_footer_branch
      %10 = sbr.rel target = $region3
    $region8: #{spatial_att.1} parent=1 // loop_exit
      _
    %443 = vsyncpa [#allocation4], 1
    %s444 = scalar_lea.sflag [#allocation4], 1
    %445 = vsyncpa %s444, 1

</llo_original>
